<compile_context>
chip_gen: v5e
topology: v5e:2x2
jax: 0.10.0
libtpu: 0.0.40
codegen_flags: <defaults>
</compile_context>

<pallas_src>
import jax
import jax.numpy as jnp
from jax.experimental import pallas as pl
from jax.experimental.pallas import tpu as pltpu


def pool_fc_kernel(h_ref, m_ref, inv_ref, w_ref, b_ref, out_ref, acc_ref):
    """One (batch-tile, seq-tile) grid step.

    h_ref  : (B_T, S_T, H)  hidden states (producer dtype: f32 or bf16)
    m_ref  : (B_T, 1, S_T)  attention mask, exact 0/1 values, h's dtype
    inv_ref: (B_T, 1)       1 / clamp(sum(mask), 1e-9), f32 (resident)
    w_ref  : (H, C_PAD)     fc weight^T, lane-padded to 128, f32 (resident)
    b_ref  : (1, C_PAD)     fc bias, lane-padded, f32 (resident)
    out_ref: (B_T, C_PAD)   logits, f32 (lane-dense store)
    acc_ref: (B_T, 1, H)    f32 VMEM accumulator, persists across the S axis
    """
    s = pl.program_id(1)

    @pl.when(s == 0)
    def _():
        acc_ref[...] = jnp.zeros_like(acc_ref)

    # Masked sum over this sequence tile as a single batched contraction on the
    # MXU (one (1,S_T)@(S_T,H) per batch row) — no per-row value slicing or
    # concatenation epilogue; the f32 accumulation happens in the MXU output.
    acc_ref[...] += jnp.einsum(
        'bqs,bsh->bqh', m_ref[...], h_ref[...],
        preferred_element_type=jnp.float32)

    # Finalize on the last sequence tile: mean divide in f32, fc matmul + bias,
    # lane-dense (128-wide) store.
    @pl.when(s == pl.num_programs(1) - 1)
    def _():
        pooled = acc_ref[:, 0, :] * inv_ref[...]          # (B_T, H) f32 mean
        logits = jnp.dot(pooled, w_ref[...],
                         preferred_element_type=jnp.float32)
        out_ref[...] = (logits + b_ref[...]).astype(out_ref.dtype)


def _pick_s_tile(seq_len, max_tile):
    """Largest 128-multiple divisor of seq_len that is <= max_tile, else full."""
    t = (min(max_tile, seq_len) // 128) * 128
    while t >= 128:
        if seq_len % t == 0:
            return t
        t -= 128
    return seq_len


def mean_pool_fc(last_hidden_state, attention_mask, weight_t, bias, *,
                 b_tile=16, s_tile=512):
    """MeanPooling(last_hidden_state, attention_mask) followed by the fc head.

    last_hidden_state: [B, S, H] (f32 or bf16 — used as-is, no wrapper cast)
    attention_mask   : [B, S]    (0/1)
    weight_t         : [H, C]    fc weight transposed
    bias             : [C]
    returns          : [B, C]    f32 logits
    """
    B, S, H = last_hidden_state.shape
    C = weight_t.shape[1]

    # No full-array cast here: the kernel is HBM-bound on this read; a wrapper
    # cast would add a full extra HBM pass (read 4 B + write 2 B per element).
    h = last_hidden_state
    h_dtype = h.dtype
    itemsize = jnp.dtype(h_dtype).itemsize

    # ---- wrapper-side prep: O(B*S) / O(H*C), negligible vs the [B,S,H] read ----
    m_f32 = attention_mask.astype(jnp.float32)
    # Mean divisor kept out of the hot path and in f32 (applied at finalize),
    # so the in-kernel mask stays exact 0/1 (representable in bf16).
    inv_den = 1.0 / jnp.maximum(jnp.sum(m_f32, axis=1, keepdims=True), 1e-9)
    # Pre-shape the mask to (B, 1, S): the in-kernel contraction is then the
    # standard batched-matmul pattern with no in-kernel expand/reshape.
    m = m_f32.astype(h_dtype).reshape(B, 1, S)

    # Lane-dense output: pad class dim to a multiple of 128 (unmasked vst).
    # Weight/bias stay f32 (tiny, resident) so the head adds no extra rounding.
    c_pad = max(128, ((C + 127) // 128) * 128)
    w = jnp.zeros((H, c_pad), jnp.float32).at[:, :C].set(
        weight_t.astype(jnp.float32))
    b2 = jnp.zeros((1, c_pad), jnp.float32).at[:, :C].set(
        bias.astype(jnp.float32))

    # ---- tiling ----
    b_tile = min(b_tile, B)
    # v7x has 2 TensorCores and only the batch axis is "parallel": if B fits in
    # a single tile but splits into two sublane-aligned halves, use two tiles.
    if pl.cdiv(B, b_tile) < 2 and B >= 16 and (B // 2) % 8 == 0:
        b_tile = B // 2

    # Keep the double-buffered hidden-state window <= ~24 MiB: fits the 32 MiB
    # scoped-VMEM default on v6e/v7x; we raise the limit explicitly so the same
    # config also fits on v5e (16 MiB default, 128 MiB physical).
    h_window_budget = 24 << 20
    max_s = max(128, h_window_budget // (2 * b_tile * H * itemsize))
    s_tile = _pick_s_tile(S, min(s_tile, max_s))

    grid = (pl.cdiv(B, b_tile), pl.cdiv(S, s_tile))
    # When B % b_tile != 0 the last batch block computes on out-of-range rows;
    # the contraction and fc matmul are row-independent, so padded-row garbage
    # never reaches in-bounds rows, and the store is clipped on writeback.

    out_padded = pl.pallas_call(
        pool_fc_kernel,
        out_shape=jax.ShapeDtypeStruct((B, c_pad), jnp.float32),
        grid=grid,
        in_specs=[
            pl.BlockSpec((b_tile, s_tile, H), lambda i, s: (i, s, 0)),
            pl.BlockSpec((b_tile, 1, s_tile), lambda i, s: (i, 0, s)),
            pl.BlockSpec((b_tile, 1), lambda i, s: (i, 0)),      # inv_den
            pl.BlockSpec((H, c_pad), lambda i, s: (0, 0)),       # resident W
            pl.BlockSpec((1, c_pad), lambda i, s: (0, 0)),       # resident b
        ],
        out_specs=pl.BlockSpec((b_tile, c_pad), lambda i, s: (i, 0)),
        scratch_shapes=[pltpu.VMEM((b_tile, 1, H), jnp.float32)],
        compiler_params=pltpu.CompilerParams(
            # batch axis shards across v7x's 2 TCs; S is the reduction axis.
            dimension_semantics=("parallel", "arbitrary"),
            vmem_limit_bytes=48 << 20),
    )(h, m, inv_den, w, b2)

    return out_padded[:, :C]


def reference(last_hidden_state, attention_mask, weight_t, bias):
    m = attention_mask[:, :, None].astype(jnp.float32)
    s = jnp.sum(last_hidden_state.astype(jnp.float32) * m, axis=1)
    sm = jnp.maximum(jnp.sum(m, axis=1), 1e-9)
    pooled = s / sm
    return pooled @ weight_t.astype(jnp.float32) + bias.astype(jnp.float32)


if __name__ == "__main__":
    # Small shapes consistent with the module's forward:
    # batch=2, seq=8, EMBEDDING_DIM=32, NUM_CLASSES=4
    B, S, H, C = 2, 8, 32, 4
    key = jax.random.PRNGKey(0)
    k1, k2, k3, k4 = jax.random.split(key, 4)

    # "last_hidden_state" stands in for the (frozen) BERT backbone output.
    last_hidden = jax.random.normal(k1, (B, S, H), dtype=jnp.float32)
    # attention_mask: 0/1, at least one valid token per row.
    mask = (jax.random.uniform(k2, (B, S)) > 0.3).astype(jnp.float32)
    mask = mask.at[:, 0].set(1.0)

    # Deterministic fc parameters (nn.Linear(EMBEDDING_DIM, NUM_CLASSES)),
    # stored transposed as [H, C].
    weight_t = jax.random.normal(k3, (H, C), dtype=jnp.float32) * 0.05
    bias = jax.random.normal(k4, (C,), dtype=jnp.float32) * 0.05

    ref = reference(last_hidden, mask, weight_t, bias)

    # f32 path (producer emits f32).
    out = jax.block_until_ready(mean_pool_fc(last_hidden, mask, weight_t, bias))
    assert out.shape == (B, C)
    assert jnp.allclose(out, ref, atol=1e-5, rtol=1e-5), (out, ref)

    # bf16 path: this cast stands in for a backbone that already emits bf16
    # (the wrapper/kernel never re-cast the [B, S, H] array themselves).
    out_bf16 = jax.block_until_ready(
        mean_pool_fc(last_hidden.astype(jnp.bfloat16), mask, weight_t, bias))
    assert jnp.allclose(out_bf16, ref, atol=2e-2, rtol=2e-2), (out_bf16, ref)

    print("KERNEL_OK")
</pallas_src>

<mosaic_0001>
module attributes {stable_mosaic.version = 11 : i64} {
  func.func @pool_fc_kernel(%arg0: i32, %arg1: i32, %arg2: memref<2x8x32xf32, #tpu.memory_space<vmem>>, %arg3: memref<2x1x8xf32, #tpu.memory_space<vmem>>, %arg4: memref<2x1xf32, #tpu.memory_space<vmem>>, %arg5: memref<32x128xf32, #tpu.memory_space<vmem>>, %arg6: memref<1x128xf32, #tpu.memory_space<vmem>>, %arg7: memref<2x128xf32, #tpu.memory_space<vmem>>, %arg8: memref<2x1x32xf32, #tpu.memory_space<vmem>>) attributes {dimension_semantics = [#tpu.dimension_semantics<parallel>, #tpu.dimension_semantics<arbitrary>], iteration_bounds = array<i64: 1, 1>, scalar_prefetch = 0 : i64, scratch_operands = 1 : i64, tpu.core_type = #tpu.core_type<tc>, window_params = [{transform_indices = @transform_0, window_bounds = array<i64: 2, 8, 32>}, {transform_indices = @transform_1, window_bounds = array<i64: 2, 1, 8>}, {transform_indices = @transform_2, window_bounds = array<i64: 2, 1>}, {pipeline_mode = #tpu.pipeline_mode<synchronous>, transform_indices = @transform_3, window_bounds = array<i64: 32, 128>}, {pipeline_mode = #tpu.pipeline_mode<synchronous>, transform_indices = @transform_4, window_bounds = array<i64: 1, 128>}, {transform_indices = @transform_5, window_bounds = array<i64: 2, 128>}]} {
    %c0_i32 = arith.constant 0 : i32
    %0 = arith.cmpi eq, %arg1, %c0_i32 : i32
    %1 = arith.extui %0 : i1 to i32
    %c0_i32_0 = arith.constant 0 : i32
    %2 = arith.cmpi ne, %1, %c0_i32_0 : i32
    scf.if %2 {
      %cst_14 = arith.constant 0.000000e+00 : f32
      %12 = vector.broadcast %cst_14 : f32 to vector<2x1x32xf32>
      %c0_15 = arith.constant 0 : index
      %c0_16 = arith.constant 0 : index
      %c0_17 = arith.constant 0 : index
      %13 = vector.load %arg8[%c0_15, %c0_16, %c0_17] : memref<2x1x32xf32, #tpu.memory_space<vmem>>, vector<2x1x32xf32>
      tpu.vector_store %arg8[%c0_15, %c0_16, %c0_17], %12 {strides = array<i32>} : memref<2x1x32xf32, #tpu.memory_space<vmem>>, vector<2x1x32xf32>,
    } else {
    }
    %c0 = arith.constant 0 : index
    %c0_1 = arith.constant 0 : index
    %c0_2 = arith.constant 0 : index
    %3 = vector.load %arg8[%c0, %c0_1, %c0_2] : memref<2x1x32xf32, #tpu.memory_space<vmem>>, vector<2x1x32xf32>
    %c0_3 = arith.constant 0 : index
    %c0_4 = arith.constant 0 : index
    %c0_5 = arith.constant 0 : index
    %4 = vector.load %arg3[%c0_3, %c0_4, %c0_5] : memref<2x1x8xf32, #tpu.memory_space<vmem>>, vector<2x1x8xf32>
    %c0_6 = arith.constant 0 : index
    %c0_7 = arith.constant 0 : index
    %c0_8 = arith.constant 0 : index
    %5 = vector.load %arg2[%c0_6, %c0_7, %c0_8] : memref<2x8x32xf32, #tpu.memory_space<vmem>>, vector<2x8x32xf32>
    "tpu.trace_start"() <{level = 10 : i32, message = "bqs,bsh->bqh"}> : () -> ()
    %cst = arith.constant dense<0.000000e+00> : vector<2x1x32xf32>
    %6 = tpu.matmul %4, %5, %cst {dimension_numbers = #tpu.dot_dimension_numbers<[2], [1], [1], [2], [0, 0, 0, 1, 1, 2], [0], [0]>} : vector<2x1x8xf32>, vector<2x8x32xf32>, vector<2x1x32xf32> -> vector<2x1x32xf32>
    "tpu.trace_stop"() : () -> ()
    %7 = arith.addf %3, %6 : vector<2x1x32xf32>
    %c0_9 = arith.constant 0 : index
    %c0_10 = arith.constant 0 : index
    %c0_11 = arith.constant 0 : index
    %8 = vector.load %arg8[%c0_9, %c0_10, %c0_11] : memref<2x1x32xf32, #tpu.memory_space<vmem>>, vector<2x1x32xf32>
    tpu.vector_store %arg8[%c0_9, %c0_10, %c0_11], %7 {strides = array<i32>} : memref<2x1x32xf32, #tpu.memory_space<vmem>>, vector<2x1x32xf32>,
    %c0_i32_12 = arith.constant 0 : i32
    %9 = arith.cmpi eq, %arg1, %c0_i32_12 : i32
    %10 = arith.extui %9 : i1 to i32
    %c0_i32_13 = arith.constant 0 : i32
    %11 = arith.cmpi ne, %10, %c0_i32_13 : i32
    scf.if %11 {
      %c0_14 = arith.constant 0 : index
      %c0_15 = arith.constant 0 : index
      %c0_16 = arith.constant 0 : index
      %12 = vector.load %arg8[%c0_14, %c0_15, %c0_16] : memref<2x1x32xf32, #tpu.memory_space<vmem>>, vector<2x1x32xf32>
      %13 = vector.shape_cast %12 : vector<2x1x32xf32> to vector<2x32xf32>
      %c0_17 = arith.constant 0 : index
      %c0_18 = arith.constant 0 : index
      %14 = vector.load %arg4[%c0_17, %c0_18] : memref<2x1xf32, #tpu.memory_space<vmem>>, vector<2x1xf32>
      %15 = vector.broadcast %14 : vector<2x1xf32> to vector<2x32xf32>
      %16 = arith.mulf %13, %15 : vector<2x32xf32>
      %c0_19 = arith.constant 0 : index
      %c0_20 = arith.constant 0 : index
      %17 = vector.load %arg5[%c0_19, %c0_20] : memref<32x128xf32, #tpu.memory_space<vmem>>, vector<32x128xf32>
      %cst_21 = arith.constant dense<0.000000e+00> : vector<2x128xf32>
      %18 = tpu.matmul %16, %17, %cst_21 {dimension_numbers = #tpu.dot_dimension_numbers<[1], [0], [0], [1], [0, 0, 1, 1], [], []>} : vector<2x32xf32>, vector<32x128xf32>, vector<2x128xf32> -> vector<2x128xf32>
      %c0_22 = arith.constant 0 : index
      %c0_23 = arith.constant 0 : index
      %19 = vector.load %arg6[%c0_22, %c0_23] : memref<1x128xf32, #tpu.memory_space<vmem>>, vector<1x128xf32>
      %20 = vector.broadcast %19 : vector<1x128xf32> to vector<2x128xf32>
      %21 = arith.addf %18, %20 : vector<2x128xf32>
      %c0_24 = arith.constant 0 : index
      %c0_25 = arith.constant 0 : index
      %22 = vector.load %arg7[%c0_24, %c0_25] : memref<2x128xf32, #tpu.memory_space<vmem>>, vector<2x128xf32>
      tpu.vector_store %arg7[%c0_24, %c0_25], %21 {strides = array<i32>} : memref<2x128xf32, #tpu.memory_space<vmem>>, vector<2x128xf32>,
    } else {
    }
    return
  }
  func.func @transform_0(%arg0: i32, %arg1: i32) -> (i32, i32, i32) {
    %c0_i32 = arith.constant 0 : i32
    %c0_i32_0 = arith.constant 0 : i32
    return %arg0, %arg1, %c0_i32 : i32, i32, i32
  }
  func.func @transform_1(%arg0: i32, %arg1: i32) -> (i32, i32, i32) {
    %c0_i32 = arith.constant 0 : i32
    %c0_i32_0 = arith.constant 0 : i32
    return %arg0, %c0_i32, %arg1 : i32, i32, i32
  }
  func.func @transform_2(%arg0: i32, %arg1: i32) -> (i32, i32) {
    %c0_i32 = arith.constant 0 : i32
    %c0_i32_0 = arith.constant 0 : i32
    return %arg0, %c0_i32 : i32, i32
  }
  func.func @transform_3(%arg0: i32, %arg1: i32) -> (i32, i32) {
    %c0_i32 = arith.constant 0 : i32
    %c0_i32_0 = arith.constant 0 : i32
    %c0_i32_1 = arith.constant 0 : i32
    return %c0_i32, %c0_i32_0 : i32, i32
  }
  func.func @transform_4(%arg0: i32, %arg1: i32) -> (i32, i32) {
    %c0_i32 = arith.constant 0 : i32
    %c0_i32_0 = arith.constant 0 : i32
    %c0_i32_1 = arith.constant 0 : i32
    return %c0_i32, %c0_i32_0 : i32, i32
  }
  func.func @transform_5(%arg0: i32, %arg1: i32) -> (i32, i32) {
    %c0_i32 = arith.constant 0 : i32
    %c0_i32_0 = arith.constant 0 : i32
    return %arg0, %c0_i32 : i32, i32
  }
}

</mosaic_0001>

<llo_original>
// kernel: tpu_custom_call.1
$region0: #{tpu_custom_call.1}
  #allocation0 [shape = 'u32[]', space=smem, size = 0x4, offset = 0x4, fixed_abs, tag = 'smem constant byte address 0x4 - core index']
  #allocation1 [shape = 'u32[72,128]{1,0:T(1,128)}', space=vmem, size = 0x9000, scoped, tag = 'internal scratch']
  #allocation2 [shape = 'f32[2,1,32]{2,1,0:T(1,128)}', space=vmem, size = 0x400, scoped, tag = 'scratch operand']
  %s0 = inlined_call_operand.hbm [shape: f32[2,8,32], index: 0, kind: input, shape index: {}]
  %s1 = inlined_call_operand.vmem [shape: f32[2,1,8], index: 1, kind: input, shape index: {}]
  %s2 = inlined_call_operand.vmem [shape: f32[2,1], index: 2, kind: input, shape index: {}]
  %s3 = inlined_call_operand.hbm [shape: f32[32,128], index: 3, kind: input, shape index: {}]
  %s4 = inlined_call_operand.vmem [shape: f32[1,128], index: 4, kind: input, shape index: {}]
  %s5 = inlined_call_operand.hbm [shape: f32[2,128], index: 5, kind: output, shape index: {}]
  %s6 = sld [smem:[#allocation0]]
  $region46: #{tpu_custom_call.1} parent=0
    _
  %s8 = ssub.s32 1, %s6
  %s9 = scalar_select 0, %s8, %s6
  $region1: #{tpu_custom_call.1} parent=0
    #allocation3 [shape = 'u8[8192]{0}', space=vmem, size = 0x2000, scoped, tag = 'input window, operand 0, single buffered']
    #allocation4 [shape = 's32[1]{0}', space=sflag, size = 0x4, scoped, tag = 'scoped memory for tpu_custom_call.1']
    #allocation5 [shape = 's32[1]{0}', space=sflag, size = 0x4, scoped, tag = 'scoped memory for tpu_custom_call.1']
    #allocation6 [shape = 'u8[16384]{0}', space=vmem, size = 0x4000, scoped, tag = 'input window, operand 3, single buffered']
    #allocation7 [shape = 's32[1]{0}', space=sflag, size = 0x4, scoped, tag = 'scoped memory for tpu_custom_call.1']
    #allocation8 [shape = 'u8[1024]{0}', space=vmem, size = 0x400, scoped, tag = 'output window, operand 0, single buffered']
    %10 = vsyncpa [#allocation4], 0
    %11 = vsyncpa [#allocation7], 0
    %12 = vsyncpa [#allocation5], 0
    // Predicated region
    $region2: #{tpu_custom_call.1} parent=1 // pred_check
      _
    $region3: #{tpu_custom_call.1} parent=1 // pred_check_branch
      %14 = sbr.rel (0) target = $region5
    $region4: #{tpu_custom_call.1} parent=1 // pred_region
      %16 = vsyncadd [#allocation4], 0
      %s17 = sshll.u32 %s0, 4
      %s18 = int_to_ptr.hbm [resolvable:$true] %s17
      %s19 = sshll.u32 [#allocation3], 4
      %s20 = int_to_ptr.vmem [resolvable:$true] %s19
      %25 = dma.hbm_to_vmem [thread:$0]  %s18, 256, %s20, [#allocation4], 128, 128, 8
    $region5: #{tpu_custom_call.1} parent=1 // pred_fallthru
      _
    // Predicated region
    $region6: #{tpu_custom_call.1} parent=1 // pred_check
      _
    $region7: #{tpu_custom_call.1} parent=1 // pred_check_branch
      %27 = sbr.rel (0) target = $region9
    $region8: #{tpu_custom_call.1} parent=1 // pred_region
      _
    $region9: #{tpu_custom_call.1} parent=1 // pred_fallthru
      _
    // Predicated region
    $region10: #{tpu_custom_call.1} parent=1 // pred_check
      _
    $region11: #{tpu_custom_call.1} parent=1 // pred_check_branch
      %29 = sbr.rel (0) target = $region13
    $region12: #{tpu_custom_call.1} parent=1 // pred_region
      _
    $region13: #{tpu_custom_call.1} parent=1 // pred_fallthru
      _
    // Predicated region
    $region14: #{tpu_custom_call.1} parent=1 // pred_check
      _
    $region15: #{tpu_custom_call.1} parent=1 // pred_check_branch
      %31 = sbr.rel (0) target = $region17
    $region16: #{tpu_custom_call.1} parent=1 // pred_region
      %33 = vsyncadd [#allocation7], 0
      %s34 = sshll.u32 %s3, 4
      %s35 = int_to_ptr.hbm [resolvable:$true] %s34
      %s36 = sshll.u32 [#allocation6], 4
      %s37 = int_to_ptr.vmem [resolvable:$true] %s36
      %42 = dma.hbm_to_vmem [thread:$0]  %s35, 512, %s37, [#allocation7], 128, 128, 8
    $region17: #{tpu_custom_call.1} parent=1 // pred_fallthru
      _
    // Predicated region
    $region18: #{tpu_custom_call.1} parent=1 // pred_check
      _
    $region19: #{tpu_custom_call.1} parent=1 // pred_check_branch
      %44 = sbr.rel (0) target = $region21
    $region20: #{tpu_custom_call.1} parent=1 // pred_region
      _
    $region21: #{tpu_custom_call.1} parent=1 // pred_fallthru
      _
    // Predicated region
    $region22: #{tpu_custom_call.1} parent=1 // pred_check
      _
    $region23: #{tpu_custom_call.1} parent=1 // pred_check_branch
      %46 = sbr.rel (0) target = $region25
    $region24: #{tpu_custom_call.1} parent=1 // pred_region
      %48 = dma.done [#allocation4], 256
    $region25: #{tpu_custom_call.1} parent=1 // pred_fallthru
      _
    // Predicated region
    $region26: #{tpu_custom_call.1} parent=1 // pred_check
      _
    $region27: #{tpu_custom_call.1} parent=1 // pred_check_branch
      %50 = sbr.rel (0) target = $region29
    $region28: #{tpu_custom_call.1} parent=1 // pred_region
      %52 = dma.done [#allocation7], 512
    $region29: #{tpu_custom_call.1} parent=1 // pred_fallthru
      _
    %p53 = scmp.eq.s32.totalorder 0, 0
    // Predicated region
    $region30: #{tpu_custom_call.1} parent=1 // pred_check
      %p54 = pneg %p53
    $region31: #{tpu_custom_call.1} parent=1 // pred_check_branch
      %56 = sbr.rel (%p54) target = $region33
    $region32: #{tpu_custom_call.1} parent=1 // pred_region
      %vm57 = vcmask 253952
      %58 = vst.msk [vmem:[#allocation2] sm:$0x1] %vm57, 0.0
      %59 = vst.msk [vmem:[#allocation2 + $0x1] sm:$0x1] %vm57, 0.0
    $region33: #{tpu_custom_call.1} parent=1 // pred_fallthru
      _
    %v60 = vld [vmem:[#allocation2] sm:$0x1]
    %v61 = vld [vmem:[#allocation2 + $0x1] sm:$0x1]
    %v62 = vld [vmem:[%s1] sm:$0x1]
    %v63 = vld [vmem:[%s1 + $0x1] sm:$0x1]
    %v64 = vld [vmem:[#allocation3] sm:$0xff]
    %v65 = vld [vmem:[#allocation3 + $0x8] sm:$0xff]
    %vm66 = vcmask 64512
    %v68 = vsel %vm66, %v62, 0
    %70 = vmatpush.msra.mxu0 0.0
    %71 = vmatpush.msra.mxu0 0.0
    %72 = vmatpush.msra.mxu0 0.0
    %73 = vmatpush.msra.mxu0 0.0
    %74 = vmatpush.msra.mxu0 0.0
    %75 = vmatpush.msra.mxu0 0.0
    %76 = vmatpush.msra.mxu0 0.0
    %77 = vmatpush.msra.mxu0 0.0
    %78 = vmatpush.msra.mxu0 0.0
    %79 = vmatpush.msra.mxu0 0.0
    %80 = vmatpush.msra.mxu0 0.0
    %81 = vmatpush.msra.mxu0 0.0
    %82 = vmatpush.msra.mxu0 0.0
    %83 = vmatpush.msra.mxu0 0.0
    %84 = vmatpush.msra.mxu0 0.0
    %85 = vmatpush.msra.mxu0 %v64
    %86 = vmatmul.f32.gmra.mxu0 %v68
    %v87 = vpop.f32.mrf.mxu0
    %v88 = vadd.f32 0.0, %v87
    %89 = vdwg.mxu0
    %v91 = vsel %vm66, %v63, 0
    %93 = vmatpush.msra.mxu0 0.0
    %94 = vmatpush.msra.mxu0 0.0
    %95 = vmatpush.msra.mxu0 0.0
    %96 = vmatpush.msra.mxu0 0.0
    %97 = vmatpush.msra.mxu0 0.0
    %98 = vmatpush.msra.mxu0 0.0
    %99 = vmatpush.msra.mxu0 0.0
    %100 = vmatpush.msra.mxu0 0.0
    %101 = vmatpush.msra.mxu0 0.0
    %102 = vmatpush.msra.mxu0 0.0
    %103 = vmatpush.msra.mxu0 0.0
    %104 = vmatpush.msra.mxu0 0.0
    %105 = vmatpush.msra.mxu0 0.0
    %106 = vmatpush.msra.mxu0 0.0
    %107 = vmatpush.msra.mxu0 0.0
    %108 = vmatpush.msra.mxu0 %v65
    %109 = vmatmul.f32.gmra.mxu0 %v91
    %v110 = vpop.f32.mrf.mxu0
    %v111 = vadd.f32 0.0, %v110
    %112 = vdwg.mxu0
    %v113 = vadd.f32 %v60, %v88
    %v114 = vadd.f32 %v61, %v111
    %vm115 = vcmask 253952
    %116 = vst.msk [vmem:[#allocation2] sm:$0x1] %vm115, %v113
    %117 = vst.msk [vmem:[#allocation2 + $0x1] sm:$0x1] %vm115, %v114
    // Predicated region
    $region34: #{tpu_custom_call.1} parent=1 // pred_check
      %p118 = pneg %p53
    $region35: #{tpu_custom_call.1} parent=1 // pred_check_branch
      %120 = sbr.rel (%p118) target = $region37
    $region36: #{tpu_custom_call.1} parent=1 // pred_region
      %v121 = vld [vmem:[#allocation2] sm:$0x1]
      %v122 = vld [vmem:[#allocation2 + $0x1] sm:$0x1]
      %v123 = vld [vmem:[%s2] sm:$0x3]
      %125 = vset.pattern.permute.xlu0 0
      %126 = vperm.xlu0 %125, %v123
      %v127 = vpop.permute.xlu0 %126
      %v128 = vperm.slane %v127, 0
      %v129 = vperm.slane %v127, 1
      %v132 = vmul.f32 %v121, %v128
      %v133 = vmul.f32 %v122, %v129
      %v134 = vld [vmem:[#allocation6] sm:$0xff]
      %v135 = vld [vmem:[#allocation6 + $0x8] sm:$0xff]
      %v136 = vld [vmem:[#allocation6 + $0x10] sm:$0xff]
      %v137 = vld [vmem:[#allocation6 + $0x18] sm:$0xff]
      %v138 = vld [vmem:[%s4] sm:$0x1]
      %v140 = vperm.slane %v138, 0
      %144 = vst [vmem:[#allocation1] ss:$9 sm:$0xff] %v132
      %s145 = scalar_lea.vmem [#allocation1], 1
      %146 = vst [vmem:[%s145] ss:$9 sm:$0xff] %v133
      %v147 = vld [vmem:[#allocation1] sm:$0xff]
      %vm148 = vcmask 261120
      %v149 = vsel %vm148, %v147, 0
      %151 = vmatpush.msra.mxu0 0.0
      %152 = vmatpush.msra.mxu0 0.0
      %153 = vmatpush.msra.mxu0 0.0
      %154 = vmatpush.msra.mxu0 0.0
      %155 = vmatpush.msra.mxu0 0.0
      %156 = vmatpush.msra.mxu0 0.0
      %157 = vmatpush.msra.mxu0 0.0
      %158 = vmatpush.msra.mxu0 0.0
      %159 = vmatpush.msra.mxu0 0.0
      %160 = vmatpush.msra.mxu0 0.0
      %161 = vmatpush.msra.mxu0 0.0
      %162 = vmatpush.msra.mxu0 0.0
      %163 = vmatpush.msra.mxu0 %v137
      %164 = vmatpush.msra.mxu0 %v136
      %165 = vmatpush.msra.mxu0 %v135
      %166 = vmatpush.msra.mxu0 %v134
      %167 = vmatmul.f32.gmra.mxu0 %v149
      %v168 = vpop.f32.mrf.mxu0
      %v169 = vadd.f32 %v140, %v168
      %170 = vdwg.mxu0
      %171 = vst [vmem:[#allocation8] sm:$0x3] %v169
    $region37: #{tpu_custom_call.1} parent=1 // pred_fallthru
      _
    // Predicated region
    $region38: #{tpu_custom_call.1} parent=1 // pred_check
      _
    $region39: #{tpu_custom_call.1} parent=1 // pred_check_branch
      %173 = sbr.rel (0) target = $region41
    $region40: #{tpu_custom_call.1} parent=1 // pred_region
      %175 = vsyncadd [#allocation5], 0
      %s177 = sshll.u32 [#allocation8], 4
      %s178 = int_to_ptr.vmem [resolvable:$true] %s177
      %s179 = sshll.u32 %s5, 4
      %s180 = int_to_ptr.hbm [resolvable:$true] %s179
      %182 = dma.vmem_to_hbm [thread:$0]  %s178, 32, %s180, [#allocation5]
    $region41: #{tpu_custom_call.1} parent=1 // pred_fallthru
      _
    // Predicated region
    $region42: #{tpu_custom_call.1} parent=1 // pred_check
      _
    $region43: #{tpu_custom_call.1} parent=1 // pred_check_branch
      %184 = sbr.rel (0) target = $region45
    $region44: #{tpu_custom_call.1} parent=1 // pred_region
      %186 = dma.done [#allocation5], 32
    $region45: #{tpu_custom_call.1} parent=1 // pred_fallthru
      _
    %187 = vsyncpa [#allocation4], 1
    %188 = vsyncpa [#allocation7], 1
    %189 = vsyncpa [#allocation5], 1

</llo_original>
